<compile_context>
chip_gen: v7x
topology: tpu7x:2x2x1
jax: 0.10.0
libtpu: 0.0.40
codegen_flags: <defaults>
</compile_context>

<pallas_src>
import jax
import jax.numpy as jnp
from jax.experimental import pallas as pl
from jax.experimental.pallas import tpu as pltpu

_LANES = 128


def _two_tower_kernel(x_ref, w_ref, b_ref, o_ref):
    # One fused MXU matmul: [tb, Din] @ [Din, O_pad] -> f32 [tb, O_pad]
    acc = jnp.dot(x_ref[...], w_ref[...], preferred_element_type=jnp.float32)
    # Bias add in f32 on the VPU (free under the MXU/DMA-bound schedule),
    # then a single lane-dense store.
    o_ref[...] = (acc + b_ref[...]).astype(o_ref.dtype)


def two_tower_forward(user_x, content_x, w_user, b_user, w_content, b_content,
                      *, block_b=512, compute_dtype=None):
    """user_x: [B, Du], content_x: [B, Dc],
       w_user: [Du, O], b_user: [O], w_content: [Dc, O], b_content: [O].
       Returns (user_embedding [B, O], content_embedding [B, O])."""
    B, Du = user_x.shape
    B2, Dc = content_x.shape
    assert B == B2
    O = w_user.shape[1]
    assert w_user.shape == (Du, O) and w_content.shape == (Dc, O)
    assert b_user.shape == (O,) and b_content.shape == (O,)

    out_dtype = user_x.dtype
    cdtype = out_dtype if compute_dtype is None else compute_dtype

    Din = Du + Dc
    # Lane-dense output: pad the fused 2*O-wide output up to >= 128 lanes.
    O_pad = max(_LANES, -(-(2 * O) // _LANES) * _LANES)

    # --- wrapper-side packing (layout plumbing, not compute hoisting) -----
    # Fused feature matrix [B, Du+Dc].
    x = jnp.concatenate([user_x, content_x], axis=1).astype(cdtype)

    # Block-diagonal packed weight [Din, O_pad]:
    #   rows 0:Du, cols 0:O       -> user tower
    #   rows Du:,  cols O:2*O     -> content tower
    w = jnp.zeros((Din, O_pad), cdtype)
    w = w.at[:Du, :O].set(w_user.astype(cdtype))
    w = w.at[Du:, O:2 * O].set(w_content.astype(cdtype))

    # Packed bias, kept in f32 (f32 VPU add works on every TPU generation).
    b = jnp.zeros((1, O_pad), jnp.float32)
    b = b.at[0, :O].set(b_user.astype(jnp.float32))
    b = b.at[0, O:2 * O].set(b_content.astype(jnp.float32))

    # --- batch tiling -----------------------------------------------------
    tb = min(block_b, B)
    B_pad = -(-B // tb) * tb          # round B up to a multiple of the tile
    if B_pad != B:
        x = jnp.pad(x, ((0, B_pad - B), (0, 0)))
    grid = (B_pad // tb,)

    out = pl.pallas_call(
        _two_tower_kernel,
        out_shape=jax.ShapeDtypeStruct((B_pad, O_pad), out_dtype),
        grid=grid,
        in_specs=[
            pl.BlockSpec((tb, Din), lambda i: (i, 0)),     # streamed batch tile
            pl.BlockSpec((Din, O_pad), lambda i: (0, 0)),  # resident weights
            pl.BlockSpec((1, O_pad), lambda i: (0, 0)),    # resident bias
        ],
        out_specs=pl.BlockSpec((tb, O_pad), lambda i: (i, 0)),
        compiler_params=pltpu.CompilerParams(
            dimension_semantics=("parallel",)),
    )(x, w, b)

    user_emb = out[:B, :O]
    content_emb = out[:B, O:2 * O]
    return user_emb, content_emb


def init_params(key, user_dim, content_dim, output_dim):
    """Deterministic init mimicking nn.Linear's U(-1/sqrt(fan_in), 1/sqrt(fan_in))."""
    k1, k2, k3, k4 = jax.random.split(key, 4)
    bu_lim = 1.0 / jnp.sqrt(user_dim)
    bc_lim = 1.0 / jnp.sqrt(content_dim)
    # stored as [in_dim, out_dim] (transpose of PyTorch's [out, in])
    w_user = jax.random.uniform(k1, (user_dim, output_dim), jnp.float32,
                                -bu_lim, bu_lim)
    b_user = jax.random.uniform(k2, (output_dim,), jnp.float32, -bu_lim, bu_lim)
    w_content = jax.random.uniform(k3, (content_dim, output_dim), jnp.float32,
                                   -bc_lim, bc_lim)
    b_content = jax.random.uniform(k4, (output_dim,), jnp.float32,
                                   -bc_lim, bc_lim)
    return w_user, b_user, w_content, b_content


if __name__ == "__main__":
    B, USER_DIM, CONTENT_DIM, OUTPUT_DIM = 2, 32, 48, 16

    key = jax.random.PRNGKey(0)
    kp, ku, kc = jax.random.split(key, 3)

    w_user, b_user, w_content, b_content = init_params(
        kp, USER_DIM, CONTENT_DIM, OUTPUT_DIM)

    user_x = jax.random.normal(ku, (B, USER_DIM), jnp.float32)
    content_x = jax.random.normal(kc, (B, CONTENT_DIM), jnp.float32)

    # small demo call (single grid step)
    user_emb, content_emb = two_tower_forward(
        user_x, content_x, w_user, b_user, w_content, b_content)
    jax.block_until_ready((user_emb, content_emb))

    # reference check against plain JAX (same math as nn.Linear)
    ref_u = user_x @ w_user + b_user
    ref_c = content_x @ w_content + b_content
    assert user_emb.shape == (B, OUTPUT_DIM)
    assert content_emb.shape == (B, OUTPUT_DIM)
    assert jnp.allclose(user_emb, ref_u, atol=1e-5, rtol=1e-5)
    assert jnp.allclose(content_emb, ref_c, atol=1e-5, rtol=1e-5)

    # second (still small) check that exercises the multi-block batch grid
    # with a ragged batch (padding path) and resident weights.
    B2 = 20
    ku2, kc2 = jax.random.split(jax.random.PRNGKey(1), 2)
    user_x2 = jax.random.normal(ku2, (B2, USER_DIM), jnp.float32)
    content_x2 = jax.random.normal(kc2, (B2, CONTENT_DIM), jnp.float32)
    u2, c2 = two_tower_forward(user_x2, content_x2,
                               w_user, b_user, w_content, b_content,
                               block_b=8)
    jax.block_until_ready((u2, c2))
    assert jnp.allclose(u2, user_x2 @ w_user + b_user, atol=1e-5, rtol=1e-5)
    assert jnp.allclose(c2, content_x2 @ w_content + b_content,
                        atol=1e-5, rtol=1e-5)

    print("KERNEL_OK")
</pallas_src>

<mosaic_0001>
module attributes {stable_mosaic.version = 11 : i64} {
  func.func @_two_tower_kernel(%arg0: i32, %arg1: memref<2x80xf32, #tpu.memory_space<vmem>>, %arg2: memref<80x128xf32, #tpu.memory_space<vmem>>, %arg3: memref<1x128xf32, #tpu.memory_space<vmem>>, %arg4: memref<2x128xf32, #tpu.memory_space<vmem>>) attributes {dimension_semantics = [#tpu.dimension_semantics<parallel>], iteration_bounds = array<i64: 1>, scalar_prefetch = 0 : i64, scratch_operands = 0 : i64, tpu.core_type = #tpu.core_type<tc>, window_params = [{transform_indices = @transform_0, window_bounds = array<i64: 2, 80>}, {pipeline_mode = #tpu.pipeline_mode<synchronous>, transform_indices = @transform_1, window_bounds = array<i64: 80, 128>}, {pipeline_mode = #tpu.pipeline_mode<synchronous>, transform_indices = @transform_2, window_bounds = array<i64: 1, 128>}, {transform_indices = @transform_3, window_bounds = array<i64: 2, 128>}]} {
    %c0 = arith.constant 0 : index
    %c0_0 = arith.constant 0 : index
    %0 = vector.load %arg1[%c0, %c0_0] : memref<2x80xf32, #tpu.memory_space<vmem>>, vector<2x80xf32>
    %c0_1 = arith.constant 0 : index
    %c0_2 = arith.constant 0 : index
    %1 = vector.load %arg2[%c0_1, %c0_2] : memref<80x128xf32, #tpu.memory_space<vmem>>, vector<80x128xf32>
    %cst = arith.constant dense<0.000000e+00> : vector<2x128xf32>
    %2 = tpu.matmul %0, %1, %cst {dimension_numbers = #tpu.dot_dimension_numbers<[1], [0], [0], [1], [0, 0, 1, 1], [], []>} : vector<2x80xf32>, vector<80x128xf32>, vector<2x128xf32> -> vector<2x128xf32>
    %c0_3 = arith.constant 0 : index
    %c0_4 = arith.constant 0 : index
    %3 = vector.load %arg3[%c0_3, %c0_4] : memref<1x128xf32, #tpu.memory_space<vmem>>, vector<1x128xf32>
    %4 = vector.broadcast %3 : vector<1x128xf32> to vector<2x128xf32>
    %5 = arith.addf %2, %4 : vector<2x128xf32>
    %c0_5 = arith.constant 0 : index
    %c0_6 = arith.constant 0 : index
    %6 = vector.load %arg4[%c0_5, %c0_6] : memref<2x128xf32, #tpu.memory_space<vmem>>, vector<2x128xf32>
    tpu.vector_store %arg4[%c0_5, %c0_6], %5 {strides = array<i32>} : memref<2x128xf32, #tpu.memory_space<vmem>>, vector<2x128xf32>,
    return
  }
  func.func @transform_0(%arg0: i32) -> (i32, i32) {
    %c0_i32 = arith.constant 0 : i32
    %c0_i32_0 = arith.constant 0 : i32
    return %arg0, %c0_i32 : i32, i32
  }
  func.func @transform_1(%arg0: i32) -> (i32, i32) {
    %c0_i32 = arith.constant 0 : i32
    %c0_i32_0 = arith.constant 0 : i32
    %c0_i32_1 = arith.constant 0 : i32
    return %c0_i32, %c0_i32_0 : i32, i32
  }
  func.func @transform_2(%arg0: i32) -> (i32, i32) {
    %c0_i32 = arith.constant 0 : i32
    %c0_i32_0 = arith.constant 0 : i32
    %c0_i32_1 = arith.constant 0 : i32
    return %c0_i32, %c0_i32_0 : i32, i32
  }
  func.func @transform_3(%arg0: i32) -> (i32, i32) {
    %c0_i32 = arith.constant 0 : i32
    %c0_i32_0 = arith.constant 0 : i32
    return %arg0, %c0_i32 : i32, i32
  }
}

</mosaic_0001>

<llo_original>
// kernel: tpu_custom_call.1
$region0: #{tpu_custom_call.1}
  #allocation0 [shape = 'u32[]', space=smem, size = 0x4, offset = 0x4, fixed_abs, tag = 'smem constant byte address 0x4 - core index']
  #allocation1 [shape = 'u32[144,128]{1,0:T(1,128)}', space=vmem, size = 0x12000, scoped, tag = 'internal scratch']
  %s0 = inlined_call_operand.hbm [shape: f32[2,80], index: 0, kind: input, shape index: {}]
  %s1 = inlined_call_operand.hbm [shape: f32[80,128], index: 1, kind: input, shape index: {}]
  %s2 = inlined_call_operand.vmem [shape: f32[1,128], index: 2, kind: input, shape index: {}]
  %s3 = inlined_call_operand.hbm [shape: f32[2,128], index: 3, kind: output, shape index: {}]
  %s4 = sld [smem:[#allocation0]]
  $region30: #{tpu_custom_call.1} parent=0
    _
  %s6 = ssub.s32 1, %s4
  %s7 = scalar_select 0, %s6, %s4
  $region1: #{tpu_custom_call.1} parent=0
    #allocation2 [shape = 'u8[1024]{0}', space=vmem, size = 0x400, scoped, tag = 'input window, operand 0, single buffered']
    #allocation3 [shape = 's32[1]{0}', space=sflag, size = 0x4, scoped, tag = 'scoped memory for tpu_custom_call.1']
    #allocation4 [shape = 's32[1]{0}', space=sflag, size = 0x4, scoped, tag = 'scoped memory for tpu_custom_call.1']
    #allocation5 [shape = 'u8[40960]{0}', space=vmem, size = 0xa000, scoped, tag = 'input window, operand 1, single buffered']
    #allocation6 [shape = 's32[1]{0}', space=sflag, size = 0x4, scoped, tag = 'scoped memory for tpu_custom_call.1']
    #allocation7 [shape = 'u8[1024]{0}', space=vmem, size = 0x400, scoped, tag = 'output window, operand 0, single buffered']
    %8 = vsyncpa [#allocation3], 0
    %9 = vsyncpa [#allocation6], 0
    %10 = vsyncpa [#allocation4], 0
    // Predicated region
    $region2: #{tpu_custom_call.1} parent=1 // pred_check
      _
    $region3: #{tpu_custom_call.1} parent=1 // pred_check_branch
      %12 = sbr.rel (0) target = $region5
    $region4: #{tpu_custom_call.1} parent=1 // pred_region
      %s14 = ssub.s32 32, 32
      %15 = vsyncadd [#allocation3], %s14
      %s17 = sshll.u32 [#allocation2], 4
      %s18 = int_to_ptr.vmem [resolvable:$true] %s17
      %20 = dma.hbm_to_vmem [thread:$0]  %s0, 32, %s18, [#allocation3]
    $region5: #{tpu_custom_call.1} parent=1 // pred_fallthru
      _
    // Predicated region
    $region6: #{tpu_custom_call.1} parent=1 // pred_check
      _
    $region7: #{tpu_custom_call.1} parent=1 // pred_check_branch
      %22 = sbr.rel (0) target = $region9
    $region8: #{tpu_custom_call.1} parent=1 // pred_region
      %s24 = ssub.s32 1280, 1280
      %25 = vsyncadd [#allocation6], %s24
      %s26 = sshll.u32 [#allocation5], 4
      %s27 = int_to_ptr.vmem [resolvable:$true] %s26
      %32 = dma.hbm_to_vmem [thread:$0]  %s1, 1280, %s27, [#allocation6], 128, 128, 8
    $region9: #{tpu_custom_call.1} parent=1 // pred_fallthru
      _
    // Predicated region
    $region10: #{tpu_custom_call.1} parent=1 // pred_check
      _
    $region11: #{tpu_custom_call.1} parent=1 // pred_check_branch
      %34 = sbr.rel (0) target = $region13
    $region12: #{tpu_custom_call.1} parent=1 // pred_region
      _
    $region13: #{tpu_custom_call.1} parent=1 // pred_fallthru
      _
    // Predicated region
    $region14: #{tpu_custom_call.1} parent=1 // pred_check
      _
    $region15: #{tpu_custom_call.1} parent=1 // pred_check_branch
      %36 = sbr.rel (0) target = $region17
    $region16: #{tpu_custom_call.1} parent=1 // pred_region
      %37 = dma.done [#allocation3], 32
    $region17: #{tpu_custom_call.1} parent=1 // pred_fallthru
      _
    // Predicated region
    $region18: #{tpu_custom_call.1} parent=1 // pred_check
      _
    $region19: #{tpu_custom_call.1} parent=1 // pred_check_branch
      %39 = sbr.rel (0) target = $region21
    $region20: #{tpu_custom_call.1} parent=1 // pred_region
      %40 = dma.done [#allocation6], 1280
    $region21: #{tpu_custom_call.1} parent=1 // pred_fallthru
      _
    %v41 = vld [vmem:[#allocation2] sm:$0x3]
    %v42 = vld [vmem:[#allocation5] sm:$0xff]
    %v43 = vld [vmem:[#allocation5 + $0x8] sm:$0xff]
    %v44 = vld [vmem:[#allocation5 + $0x10] sm:$0xff]
    %v45 = vld [vmem:[#allocation5 + $0x18] sm:$0xff]
    %v46 = vld [vmem:[#allocation5 + $0x20] sm:$0xff]
    %v47 = vld [vmem:[#allocation5 + $0x28] sm:$0xff]
    %v48 = vld [vmem:[#allocation5 + $0x30] sm:$0xff]
    %v49 = vld [vmem:[#allocation5 + $0x38] sm:$0xff]
    %v50 = vld [vmem:[#allocation5 + $0x40] sm:$0xff]
    %v51 = vld [vmem:[#allocation5 + $0x48] sm:$0xff]
    %v52 = vld [vmem:[%s2] sm:$0x1]
    %v54 = vlaneseq
    %v55 = vshrl.u32 %v54, 7
    %v56 = vsub.s32 0, %v55
    %v57 = vrot.slane %v52, %v56
    %vm59 = vcmask 654336
    %v61 = vsel %vm59, %v41, 0
    %63 = vmatprep.subr.mxu0 0.0
    %64 = vmatpush1.msra.mxu0 %v42
    %65 = vmatprep.subr.mxu0 0.0
    %66 = vmatpush1.msra.mxu0 %v43
    %67 = vmatprep.subr.mxu0 0.0
    %68 = vmatpush1.msra.mxu0 %v44
    %69 = vmatprep.subr.mxu0 0.0
    %70 = vmatpush1.msra.mxu0 %v45
    %71 = vmatprep.subr.mxu0 0.0
    %72 = vmatpush1.msra.mxu0 %v46
    %73 = vmatprep.subr.mxu0 0.0
    %74 = vmatpush1.msra.mxu0 %v47
    %75 = vmatprep.subr.mxu0 0.0
    %76 = vmatpush1.msra.mxu0 %v48
    %77 = vmatprep.subr.mxu0 0.0
    %78 = vmatpush1.msra.mxu0 %v49
    %79 = vmatprep.subr.mxu0 0.0
    %80 = vmatpush1.msra.mxu0 %v50
    %81 = vmatprep.subr.mxu0 0.0
    %82 = vmatpush1.msra.mxu0 %v51
    %83 = vmatprep.subr.mxu0 0.0
    %84 = vmatpush1.msra.mxu0 0.0
    %85 = vmatprep.subr.mxu0 0.0
    %86 = vmatpush1.msra.mxu0 0.0
    %87 = vmatprep.subr.mxu0 0.0
    %88 = vmatpush1.msra.mxu0 0.0
    %89 = vmatprep.subr.mxu0 0.0
    %90 = vmatpush1.msra.mxu0 0.0
    %91 = vmatprep.subr.mxu0 0.0
    %92 = vmatpush1.msra.mxu0 0.0
    %93 = vmatprep.subr.mxu0 0.0
    %94 = vmatpush1.msra.mxu0 0.0
    %95 = vmatprep.subr.mxu0 0.0
    %96 = vmatpush1.msra.mxu0 0.0
    %97 = vmatprep.subr.mxu0 0.0
    %98 = vmatpush1.msra.mxu0 0.0
    %99 = vmatprep.subr.mxu0 0.0
    %100 = vmatpush1.msra.mxu0 0.0
    %101 = vmatprep.subr.mxu0 0.0
    %102 = vmatpush1.msra.mxu0 0.0
    %103 = vmatprep.subr.mxu0 0.0
    %104 = vmatpush1.msra.mxu0 0.0
    %105 = vmatprep.subr.mxu0 0.0
    %106 = vmatpush1.msra.mxu0 0.0
    %107 = vmatprep.subr.mxu0 0.0
    %108 = vmatpush1.msra.mxu0 0.0
    %109 = vmatprep.subr.mxu0 0.0
    %110 = vmatpush1.msra.mxu0 0.0
    %111 = vmatprep.subr.mxu0 0.0
    %112 = vmatpush1.msra.mxu0 0.0
    %113 = vmatprep.subr.mxu0 0.0
    %114 = vmatpush1.msra.mxu0 0.0
    %115 = vmatprep.subr.mxu0 0.0
    %116 = vmatpush1.msra.mxu0 0.0
    %117 = vmatprep.subr.mxu0 0.0
    %118 = vmatpush1.msra.mxu0 0.0
    %119 = vmatprep.subr.mxu0 0.0
    %120 = vmatpush1.msra.mxu0 0.0
    %121 = vmatprep.subr.mxu0 0.0
    %122 = vmatpush1.msra.mxu0 0.0
    %123 = vmatprep.subr.mxu0 0.0
    %124 = vmatpush1.msra.mxu0 0.0
    %125 = vmatprep.subr.mxu0 0.0
    %126 = vmatpush1.msra.mxu0 0.0
    %127 = vmatprep.mubr.f32.mxu0 0.0
    %128 = vmatmul.mubr.f32.gmra.mrb[0].mxu0 %v61
    %v129 = vpop.f32.mrb[0].mxu0
    %v130 = vadd.f32 %v57, %v129
    %v131 = vpop.f32.mrb[0].mxu0
    %132 = vdwg.mxu0
    %133 = vst [vmem:[#allocation7] sm:$0x3] %v130
    // Predicated region
    $region22: #{tpu_custom_call.1} parent=1 // pred_check
      _
    $region23: #{tpu_custom_call.1} parent=1 // pred_check_branch
      %135 = sbr.rel (0) target = $region25
    $region24: #{tpu_custom_call.1} parent=1 // pred_region
      %s137 = ssub.s32 32, 32
      %138 = vsyncadd [#allocation4], %s137
      %s140 = sshll.u32 [#allocation7], 4
      %s141 = int_to_ptr.vmem [resolvable:$true] %s140
      %143 = dma.vmem_to_hbm [thread:$0]  %s141, 32, %s3, [#allocation4]
    $region25: #{tpu_custom_call.1} parent=1 // pred_fallthru
      _
    // Predicated region
    $region26: #{tpu_custom_call.1} parent=1 // pred_check
      _
    $region27: #{tpu_custom_call.1} parent=1 // pred_check_branch
      %145 = sbr.rel (0) target = $region29
    $region28: #{tpu_custom_call.1} parent=1 // pred_region
      %146 = dma.done [#allocation4], 32
    $region29: #{tpu_custom_call.1} parent=1 // pred_fallthru
      _
    %147 = vsyncpa [#allocation3], 1
    %148 = vsyncpa [#allocation6], 1
    %149 = vsyncpa [#allocation4], 1

</llo_original>
